<compile_context>
chip_gen: v7x
topology: tpu7x:2x2x1
jax: 0.10.0
libtpu: 0.0.40
codegen_flags: <defaults>
</compile_context>

<pallas_src>
import jax
import jax.numpy as jnp
from jax.experimental import pallas as pl
from jax.experimental.pallas import tpu as pltpu

# ---- small, self-consistent hyperparameters (module globals in the original) ----
B, S = 2, 16                     # batch, sequence length
WORD_EMBED_DIM = 32
DIST_EMBED_DIM = 16
INPUT_DIM = WORD_EMBED_DIM + 2 * DIST_EMBED_DIM   # 64
NUM_FILTER = 32                  # conv_filter_cnt
NUM_CLASSES = 4                  # len(relation_cls_label_map)
WORD_VOCAB = 50
DIST_VOCAB = 20
KERNEL_SIZE = 3                  # Conv1d kernel size, padding=1
BS = B * S                       # flattened rows


def cnn_kernel(wseq_ref, d1seq_ref, d2seq_ref, mask_ref,
               wemb_ref, d1emb_ref, d2emb_ref,
               wconv_ref, bconv_ref, wd_ref, bd_ref, out_ref):
    # wseq/d1seq/d2seq: (B*S, 1) int32 ids        mask: (B*S, 1) f32
    # wemb/d1emb/d2emb: (V, D) embedding tables
    # wconv: (K*C, F) conv weight, rows ordered k-major (tap, channel)
    # bconv: (1, F)   wd: (F, n_cls)   bd: (1, n_cls)
    f32 = jnp.float32

    # ---- fused embedding gathers: one-hot matmuls on the MXU ----
    def gather(idx_ref, table_ref, vocab):
        idx = idx_ref[...]                                               # (BS, 1) i32
        hot = jax.lax.broadcasted_iota(jnp.int32, (BS, vocab), 1) == idx  # (BS, V)
        return jnp.dot(hot.astype(f32), table_ref[...],
                       preferred_element_type=f32)

    we = gather(wseq_ref, wemb_ref, WORD_VOCAB)                          # (BS, 32)
    d1 = gather(d1seq_ref, d1emb_ref, DIST_VOCAB)                        # (BS, 16)
    d2 = gather(d2seq_ref, d2emb_ref, DIST_VOCAB)                        # (BS, 16)
    x = jnp.concatenate([we, d1, d2], axis=1) * mask_ref[...]            # (BS, C)

    # ---- Conv1d as a single im2col matmul (no pad/concat along sublanes) ----
    # Per-sequence +/-1 shifts (zero at sequence edges, no cross-batch leakage)
    # via 0/1 shift matrices, applied on the MXU.
    r = jax.lax.broadcasted_iota(jnp.int32, (BS, BS), 0)
    c = jax.lax.broadcasted_iota(jnp.int32, (BS, BS), 1)
    is_start = r == 0
    is_end = r == S - 1
    for b in range(1, B):
        is_start = jnp.logical_or(is_start, r == b * S)
        is_end = jnp.logical_or(is_end, r == b * S + S - 1)
    shift_prev = jnp.logical_and(c == r - 1, jnp.logical_not(is_start)).astype(f32)
    shift_next = jnp.logical_and(c == r + 1, jnp.logical_not(is_end)).astype(f32)
    x_prev = jnp.dot(shift_prev, x, preferred_element_type=f32)          # x[s-1] or 0
    x_next = jnp.dot(shift_next, x, preferred_element_type=f32)          # x[s+1] or 0

    im2col = jnp.concatenate([x_prev, x, x_next], axis=1)                # (BS, K*C)
    y = jnp.dot(im2col, wconv_ref[...], preferred_element_type=f32)      # (BS, F)
    y = y + bconv_ref[...]

    # ---- torch.max(output, 2)[0] over sequence, then tanh ----
    h = jnp.concatenate(
        [jnp.max(y[b * S:(b + 1) * S, :], axis=0, keepdims=True) for b in range(B)],
        axis=0)                                                          # (B, F)
    h = jnp.tanh(h)

    # Dropout is identity at inference (is_training=False path).
    logits = jnp.dot(h, wd_ref[...], preferred_element_type=f32) + bd_ref[...]
    out_ref[...] = logits.astype(out_ref.dtype)


def _full_spec(shape):
    zeros = (0,) * len(shape)
    return pl.BlockSpec(shape, lambda i, _z=zeros: _z)


def cnn_forward(params, words_seq, words_mask, dist1_seq, dist2_seq):
    # Flatten ids / mask to (B*S, 1) outside the kernel (metadata-only reshape)
    # so the kernel never relayouts lanes -> sublanes.
    wseq = words_seq.reshape(BS, 1).astype(jnp.int32)
    d1seq = dist1_seq.reshape(BS, 1).astype(jnp.int32)
    d2seq = dist2_seq.reshape(BS, 1).astype(jnp.int32)
    mask = words_mask.reshape(BS, 1).astype(jnp.float32)

    args = (wseq, d1seq, d2seq, mask,
            params['word_emb'], params['dist1_emb'], params['dist2_emb'],
            params['conv_w'], params['conv_b'],
            params['dense_w'], params['dense_b'])

    # Working set < 32 KB: single block, single grid step. No tiling.
    grid_spec = pl.GridSpec(
        grid=(1,),
        in_specs=[_full_spec(a.shape) for a in args],
        out_specs=_full_spec((B, NUM_CLASSES)),
    )
    return pl.pallas_call(
        cnn_kernel,
        out_shape=jax.ShapeDtypeStruct((B, NUM_CLASSES), jnp.float32),
        grid_spec=grid_spec,
        compiler_params=pltpu.CompilerParams(
            dimension_semantics=("arbitrary",)),
    )(*args)


def cnn_reference(params, words_seq, words_mask, dist1_seq, dist2_seq):
    # Pure-JAX reference mirroring the PyTorch forward.
    we = params['word_emb'][words_seq]
    d1 = params['dist1_emb'][dist1_seq]
    d2 = params['dist2_emb'][dist2_seq]
    x = jnp.concatenate([we, d1, d2], axis=2) * words_mask[:, :, None]   # (B,S,C)
    xp = jnp.pad(x, ((0, 0), (1, 1), (0, 0)))                            # (B,S+2,C)
    wconv = params['conv_w'].reshape(KERNEL_SIZE, INPUT_DIM, NUM_FILTER)
    y = sum(jnp.einsum('bsc,cf->bsf', xp[:, k:k + S, :], wconv[k],
                       preferred_element_type=jnp.float32)
            for k in range(KERNEL_SIZE))
    y = y + params['conv_b'][None]
    h = jnp.tanh(jnp.max(y, axis=1))
    return h @ params['dense_w'] + params['dense_b']


def init_params(key):
    ks = jax.random.split(key, 5)
    word_emb = 0.1 * jax.random.normal(ks[0], (WORD_VOCAB, WORD_EMBED_DIM), jnp.float32)
    word_emb = word_emb.at[0].set(0.0)          # padding_idx=0
    dist1_emb = 0.1 * jax.random.normal(ks[1], (DIST_VOCAB, DIST_EMBED_DIM), jnp.float32)
    dist1_emb = dist1_emb.at[0].set(0.0)        # padding_idx=0
    dist2_emb = 0.1 * jax.random.normal(ks[2], (DIST_VOCAB, DIST_EMBED_DIM), jnp.float32)
    dist2_emb = dist2_emb.at[0].set(0.0)        # padding_idx=0

    # Conv1d weight in torch is (F, C_in, K); store it flattened k-major as
    # (K*C_in, F): conv_w[k*C + c, f] == torch_w[f, c, k].
    conv_w_torch = 0.1 * jax.random.normal(
        ks[3], (NUM_FILTER, INPUT_DIM, KERNEL_SIZE), jnp.float32)
    conv_w = jnp.transpose(conv_w_torch, (2, 1, 0)).reshape(
        KERNEL_SIZE * INPUT_DIM, NUM_FILTER)
    conv_b = 0.01 * jnp.ones((1, NUM_FILTER), jnp.float32)

    # Linear weight in torch is (n_cls, F); store transposed (F, n_cls).
    dense_w_torch = 0.1 * jax.random.normal(ks[4], (NUM_CLASSES, NUM_FILTER), jnp.float32)
    dense_w = jnp.transpose(dense_w_torch, (1, 0))
    dense_b = 0.01 * jnp.ones((1, NUM_CLASSES), jnp.float32)

    return dict(word_emb=word_emb, dist1_emb=dist1_emb, dist2_emb=dist2_emb,
                conv_w=conv_w, conv_b=conv_b, dense_w=dense_w, dense_b=dense_b)


if __name__ == "__main__":
    key = jax.random.PRNGKey(0)
    pkey, k1, k2, k3 = jax.random.split(key, 4)
    params = init_params(pkey)

    words_seq = jax.random.randint(k1, (B, S), 1, WORD_VOCAB, dtype=jnp.int32)
    dist1_seq = jax.random.randint(k2, (B, S), 1, DIST_VOCAB, dtype=jnp.int32)
    dist2_seq = jax.random.randint(k3, (B, S), 1, DIST_VOCAB, dtype=jnp.int32)
    # mask: first sentence fully valid, second has trailing padding
    words_mask = jnp.concatenate(
        [jnp.ones((1, S), jnp.float32),
         jnp.concatenate([jnp.ones((1, S - 6), jnp.float32),
                          jnp.zeros((1, 6), jnp.float32)], axis=1)], axis=0)

    fwd = jax.jit(cnn_forward)
    probs = fwd(params, words_seq, words_mask, dist1_seq, dist2_seq)
    jax.block_until_ready(probs)
    assert probs.shape == (B, NUM_CLASSES)

    ref = cnn_reference(params, words_seq, words_mask, dist1_seq, dist2_seq)
    max_diff = float(jnp.max(jnp.abs(probs - ref)))
    assert jnp.allclose(probs, ref, rtol=1e-2, atol=1e-2), f"max abs diff {max_diff}"
    print("KERNEL_OK")
</pallas_src>

<mosaic_0001>
module attributes {stable_mosaic.version = 11 : i64} {
  func.func @cnn_kernel(%arg0: i32, %arg1: memref<32x1xi32, #tpu.memory_space<vmem>>, %arg2: memref<32x1xi32, #tpu.memory_space<vmem>>, %arg3: memref<32x1xi32, #tpu.memory_space<vmem>>, %arg4: memref<32x1xf32, #tpu.memory_space<vmem>>, %arg5: memref<50x32xf32, #tpu.memory_space<vmem>>, %arg6: memref<20x16xf32, #tpu.memory_space<vmem>>, %arg7: memref<20x16xf32, #tpu.memory_space<vmem>>, %arg8: memref<192x32xf32, #tpu.memory_space<vmem>>, %arg9: memref<1x32xf32, #tpu.memory_space<vmem>>, %arg10: memref<32x4xf32, #tpu.memory_space<vmem>>, %arg11: memref<1x4xf32, #tpu.memory_space<vmem>>, %arg12: memref<2x4xf32, #tpu.memory_space<vmem>>) attributes {dimension_semantics = [#tpu.dimension_semantics<arbitrary>], iteration_bounds = array<i64: 1>, scalar_prefetch = 0 : i64, scratch_operands = 0 : i64, tpu.core_type = #tpu.core_type<tc>, window_params = [{pipeline_mode = #tpu.pipeline_mode<synchronous>, transform_indices = @transform_0, window_bounds = array<i64: 32, 1>}, {pipeline_mode = #tpu.pipeline_mode<synchronous>, transform_indices = @transform_1, window_bounds = array<i64: 32, 1>}, {pipeline_mode = #tpu.pipeline_mode<synchronous>, transform_indices = @transform_2, window_bounds = array<i64: 32, 1>}, {pipeline_mode = #tpu.pipeline_mode<synchronous>, transform_indices = @transform_3, window_bounds = array<i64: 32, 1>}, {pipeline_mode = #tpu.pipeline_mode<synchronous>, transform_indices = @transform_4, window_bounds = array<i64: 50, 32>}, {pipeline_mode = #tpu.pipeline_mode<synchronous>, transform_indices = @transform_5, window_bounds = array<i64: 20, 16>}, {pipeline_mode = #tpu.pipeline_mode<synchronous>, transform_indices = @transform_6, window_bounds = array<i64: 20, 16>}, {pipeline_mode = #tpu.pipeline_mode<synchronous>, transform_indices = @transform_7, window_bounds = array<i64: 192, 32>}, {pipeline_mode = #tpu.pipeline_mode<synchronous>, transform_indices = @transform_8, window_bounds = array<i64: 1, 32>}, {pipeline_mode = #tpu.pipeline_mode<synchronous>, transform_indices = @transform_9, window_bounds = array<i64: 32, 4>}, {pipeline_mode = #tpu.pipeline_mode<synchronous>, transform_indices = @transform_10, window_bounds = array<i64: 1, 4>}, {pipeline_mode = #tpu.pipeline_mode<synchronous>, transform_indices = @transform_11, window_bounds = array<i64: 2, 4>}]} {
    %c0 = arith.constant 0 : index
    %c0_0 = arith.constant 0 : index
    %0 = vector.load %arg1[%c0, %c0_0] : memref<32x1xi32, #tpu.memory_space<vmem>>, vector<32x1xi32>
    %1 = tpu.iota {dimensions = array<i32: 1>} : vector<32x50xi32>
    %2 = vector.broadcast %0 : vector<32x1xi32> to vector<32x50xi32>
    %3 = arith.cmpi eq, %1, %2 : vector<32x50xi32>
    %4 = arith.extui %3 : vector<32x50xi1> to vector<32x50xi32>
    %5 = arith.sitofp %4 : vector<32x50xi32> to vector<32x50xf32>
    %c0_1 = arith.constant 0 : index
    %c0_2 = arith.constant 0 : index
    %6 = vector.load %arg5[%c0_1, %c0_2] : memref<50x32xf32, #tpu.memory_space<vmem>>, vector<50x32xf32>
    %cst = arith.constant dense<0.000000e+00> : vector<32x32xf32>
    %7 = tpu.matmul %5, %6, %cst {dimension_numbers = #tpu.dot_dimension_numbers<[1], [0], [0], [1], [0, 0, 1, 1], [], []>} : vector<32x50xf32>, vector<50x32xf32>, vector<32x32xf32> -> vector<32x32xf32>
    %c0_3 = arith.constant 0 : index
    %c0_4 = arith.constant 0 : index
    %8 = vector.load %arg2[%c0_3, %c0_4] : memref<32x1xi32, #tpu.memory_space<vmem>>, vector<32x1xi32>
    %9 = tpu.iota {dimensions = array<i32: 1>} : vector<32x20xi32>
    %10 = vector.broadcast %8 : vector<32x1xi32> to vector<32x20xi32>
    %11 = arith.cmpi eq, %9, %10 : vector<32x20xi32>
    %12 = arith.extui %11 : vector<32x20xi1> to vector<32x20xi32>
    %13 = arith.sitofp %12 : vector<32x20xi32> to vector<32x20xf32>
    %c0_5 = arith.constant 0 : index
    %c0_6 = arith.constant 0 : index
    %14 = vector.load %arg6[%c0_5, %c0_6] : memref<20x16xf32, #tpu.memory_space<vmem>>, vector<20x16xf32>
    %cst_7 = arith.constant dense<0.000000e+00> : vector<32x16xf32>
    %15 = tpu.matmul %13, %14, %cst_7 {dimension_numbers = #tpu.dot_dimension_numbers<[1], [0], [0], [1], [0, 0, 1, 1], [], []>} : vector<32x20xf32>, vector<20x16xf32>, vector<32x16xf32> -> vector<32x16xf32>
    %c0_8 = arith.constant 0 : index
    %c0_9 = arith.constant 0 : index
    %16 = vector.load %arg3[%c0_8, %c0_9] : memref<32x1xi32, #tpu.memory_space<vmem>>, vector<32x1xi32>
    %17 = tpu.iota {dimensions = array<i32: 1>} : vector<32x20xi32>
    %18 = vector.broadcast %16 : vector<32x1xi32> to vector<32x20xi32>
    %19 = arith.cmpi eq, %17, %18 : vector<32x20xi32>
    %20 = arith.extui %19 : vector<32x20xi1> to vector<32x20xi32>
    %21 = arith.sitofp %20 : vector<32x20xi32> to vector<32x20xf32>
    %c0_10 = arith.constant 0 : index
    %c0_11 = arith.constant 0 : index
    %22 = vector.load %arg7[%c0_10, %c0_11] : memref<20x16xf32, #tpu.memory_space<vmem>>, vector<20x16xf32>
    %cst_12 = arith.constant dense<0.000000e+00> : vector<32x16xf32>
    %23 = tpu.matmul %21, %22, %cst_12 {dimension_numbers = #tpu.dot_dimension_numbers<[1], [0], [0], [1], [0, 0, 1, 1], [], []>} : vector<32x20xf32>, vector<20x16xf32>, vector<32x16xf32> -> vector<32x16xf32>
    %24 = tpu.concatenate %7, %15, %23 in 1 : vector<32x32xf32>, vector<32x16xf32>, vector<32x16xf32> -> vector<32x64xf32>
    %c0_13 = arith.constant 0 : index
    %c0_14 = arith.constant 0 : index
    %25 = vector.load %arg4[%c0_13, %c0_14] : memref<32x1xf32, #tpu.memory_space<vmem>>, vector<32x1xf32>
    %26 = vector.broadcast %25 : vector<32x1xf32> to vector<32x64xf32>
    %27 = arith.mulf %24, %26 : vector<32x64xf32>
    %28 = tpu.iota {dimensions = array<i32: 0>} : vector<32x32xi32>
    %29 = tpu.iota {dimensions = array<i32: 1>} : vector<32x32xi32>
    %c0_i32 = arith.constant 0 : i32
    %30 = vector.broadcast %c0_i32 : i32 to vector<32x32xi32>
    %31 = arith.cmpi eq, %28, %30 : vector<32x32xi32>
    %c15_i32 = arith.constant 15 : i32
    %32 = vector.broadcast %c15_i32 : i32 to vector<32x32xi32>
    %33 = arith.cmpi eq, %28, %32 : vector<32x32xi32>
    %c16_i32 = arith.constant 16 : i32
    %34 = vector.broadcast %c16_i32 : i32 to vector<32x32xi32>
    %35 = arith.cmpi eq, %28, %34 : vector<32x32xi32>
    %36 = arith.ori %31, %35 : vector<32x32xi1>
    %c31_i32 = arith.constant 31 : i32
    %37 = vector.broadcast %c31_i32 : i32 to vector<32x32xi32>
    %38 = arith.cmpi eq, %28, %37 : vector<32x32xi32>
    %39 = arith.ori %33, %38 : vector<32x32xi1>
    %c1_i32 = arith.constant 1 : i32
    %40 = vector.broadcast %c1_i32 : i32 to vector<32x32xi32>
    %41 = arith.subi %28, %40 : vector<32x32xi32>
    %42 = arith.cmpi eq, %29, %41 : vector<32x32xi32>
    %cst_15 = arith.constant dense<true> : vector<32x32xi1>
    %43 = arith.xori %36, %cst_15 : vector<32x32xi1>
    %44 = arith.andi %42, %43 : vector<32x32xi1>
    %45 = arith.extui %44 : vector<32x32xi1> to vector<32x32xi32>
    %46 = arith.sitofp %45 : vector<32x32xi32> to vector<32x32xf32>
    %c1_i32_16 = arith.constant 1 : i32
    %47 = vector.broadcast %c1_i32_16 : i32 to vector<32x32xi32>
    %48 = arith.addi %28, %47 : vector<32x32xi32>
    %49 = arith.cmpi eq, %29, %48 : vector<32x32xi32>
    %cst_17 = arith.constant dense<true> : vector<32x32xi1>
    %50 = arith.xori %39, %cst_17 : vector<32x32xi1>
    %51 = arith.andi %49, %50 : vector<32x32xi1>
    %52 = arith.extui %51 : vector<32x32xi1> to vector<32x32xi32>
    %53 = arith.sitofp %52 : vector<32x32xi32> to vector<32x32xf32>
    %cst_18 = arith.constant dense<0.000000e+00> : vector<32x64xf32>
    %54 = tpu.matmul %46, %27, %cst_18 {dimension_numbers = #tpu.dot_dimension_numbers<[1], [0], [0], [1], [0, 0, 1, 1], [], []>} : vector<32x32xf32>, vector<32x64xf32>, vector<32x64xf32> -> vector<32x64xf32>
    %cst_19 = arith.constant dense<0.000000e+00> : vector<32x64xf32>
    %55 = tpu.matmul %53, %27, %cst_19 {dimension_numbers = #tpu.dot_dimension_numbers<[1], [0], [0], [1], [0, 0, 1, 1], [], []>} : vector<32x32xf32>, vector<32x64xf32>, vector<32x64xf32> -> vector<32x64xf32>
    %56 = tpu.concatenate %54, %27, %55 in 1 : vector<32x64xf32>, vector<32x64xf32>, vector<32x64xf32> -> vector<32x192xf32>
    %c0_20 = arith.constant 0 : index
    %c0_21 = arith.constant 0 : index
    %57 = vector.load %arg8[%c0_20, %c0_21] : memref<192x32xf32, #tpu.memory_space<vmem>>, vector<192x32xf32>
    %cst_22 = arith.constant dense<0.000000e+00> : vector<32x32xf32>
    %58 = tpu.matmul %56, %57, %cst_22 {dimension_numbers = #tpu.dot_dimension_numbers<[1], [0], [0], [1], [0, 0, 1, 1], [], []>} : vector<32x192xf32>, vector<192x32xf32>, vector<32x32xf32> -> vector<32x32xf32>
    %c0_23 = arith.constant 0 : index
    %c0_24 = arith.constant 0 : index
    %59 = vector.load %arg9[%c0_23, %c0_24] : memref<1x32xf32, #tpu.memory_space<vmem>>, vector<1x32xf32>
    %60 = vector.broadcast %59 : vector<1x32xf32> to vector<32x32xf32>
    %61 = arith.addf %58, %60 : vector<32x32xf32>
    %62 = vector.extract_strided_slice %61 {offsets = [0, 0], sizes = [16, 32], strides = [1, 1]} : vector<32x32xf32> to vector<16x32xf32>
    %cst_25 = arith.constant dense<0xFF800000> : vector<32xf32>
    %63 = vector.multi_reduction <maximumf>, %62, %cst_25 [0] : vector<16x32xf32> to vector<32xf32>
    %64 = vector.shape_cast %63 : vector<32xf32> to vector<1x32xf32>
    %65 = vector.extract_strided_slice %61 {offsets = [16, 0], sizes = [16, 32], strides = [1, 1]} : vector<32x32xf32> to vector<16x32xf32>
    %cst_26 = arith.constant dense<0xFF800000> : vector<32xf32>
    %66 = vector.multi_reduction <maximumf>, %65, %cst_26 [0] : vector<16x32xf32> to vector<32xf32>
    %67 = vector.shape_cast %66 : vector<32xf32> to vector<1x32xf32>
    %68 = tpu.concatenate %64, %67 in 0 : vector<1x32xf32>, vector<1x32xf32> -> vector<2x32xf32>
    %69 = math.tanh %68 : vector<2x32xf32>
    %c0_27 = arith.constant 0 : index
    %c0_28 = arith.constant 0 : index
    %70 = vector.load %arg10[%c0_27, %c0_28] : memref<32x4xf32, #tpu.memory_space<vmem>>, vector<32x4xf32>
    %cst_29 = arith.constant dense<0.000000e+00> : vector<2x4xf32>
    %71 = tpu.matmul %69, %70, %cst_29 {dimension_numbers = #tpu.dot_dimension_numbers<[1], [0], [0], [1], [0, 0, 1, 1], [], []>} : vector<2x32xf32>, vector<32x4xf32>, vector<2x4xf32> -> vector<2x4xf32>
    %c0_30 = arith.constant 0 : index
    %c0_31 = arith.constant 0 : index
    %72 = vector.load %arg11[%c0_30, %c0_31] : memref<1x4xf32, #tpu.memory_space<vmem>>, vector<1x4xf32>
    %73 = vector.broadcast %72 : vector<1x4xf32> to vector<2x4xf32>
    %74 = arith.addf %71, %73 : vector<2x4xf32>
    %c0_32 = arith.constant 0 : index
    %c0_33 = arith.constant 0 : index
    %75 = vector.load %arg12[%c0_32, %c0_33] : memref<2x4xf32, #tpu.memory_space<vmem>>, vector<2x4xf32>
    tpu.vector_store %arg12[%c0_32, %c0_33], %74 {strides = array<i32>} : memref<2x4xf32, #tpu.memory_space<vmem>>, vector<2x4xf32>,
    return
  }
  func.func @transform_0(%arg0: i32) -> (i32, i32) {
    %c0_i32 = arith.constant 0 : i32
    %c0_i32_0 = arith.constant 0 : i32
    %c0_i32_1 = arith.constant 0 : i32
    return %c0_i32, %c0_i32_0 : i32, i32
  }
  func.func @transform_1(%arg0: i32) -> (i32, i32) {
    %c0_i32 = arith.constant 0 : i32
    %c0_i32_0 = arith.constant 0 : i32
    %c0_i32_1 = arith.constant 0 : i32
    return %c0_i32, %c0_i32_0 : i32, i32
  }
  func.func @transform_2(%arg0: i32) -> (i32, i32) {
    %c0_i32 = arith.constant 0 : i32
    %c0_i32_0 = arith.constant 0 : i32
    %c0_i32_1 = arith.constant 0 : i32
    return %c0_i32, %c0_i32_0 : i32, i32
  }
  func.func @transform_3(%arg0: i32) -> (i32, i32) {
    %c0_i32 = arith.constant 0 : i32
    %c0_i32_0 = arith.constant 0 : i32
    %c0_i32_1 = arith.constant 0 : i32
    return %c0_i32, %c0_i32_0 : i32, i32
  }
  func.func @transform_4(%arg0: i32) -> (i32, i32) {
    %c0_i32 = arith.constant 0 : i32
    %c0_i32_0 = arith.constant 0 : i32
    %c0_i32_1 = arith.constant 0 : i32
    return %c0_i32, %c0_i32_0 : i32, i32
  }
  func.func @transform_5(%arg0: i32) -> (i32, i32) {
    %c0_i32 = arith.constant 0 : i32
    %c0_i32_0 = arith.constant 0 : i32
    %c0_i32_1 = arith.constant 0 : i32
    return %c0_i32, %c0_i32_0 : i32, i32
  }
  func.func @transform_6(%arg0: i32) -> (i32, i32) {
    %c0_i32 = arith.constant 0 : i32
    %c0_i32_0 = arith.constant 0 : i32
    %c0_i32_1 = arith.constant 0 : i32
    return %c0_i32, %c0_i32_0 : i32, i32
  }
  func.func @transform_7(%arg0: i32) -> (i32, i32) {
    %c0_i32 = arith.constant 0 : i32
    %c0_i32_0 = arith.constant 0 : i32
    %c0_i32_1 = arith.constant 0 : i32
    return %c0_i32, %c0_i32_0 : i32, i32
  }
  func.func @transform_8(%arg0: i32) -> (i32, i32) {
    %c0_i32 = arith.constant 0 : i32
    %c0_i32_0 = arith.constant 0 : i32
    %c0_i32_1 = arith.constant 0 : i32
    return %c0_i32, %c0_i32_0 : i32, i32
  }
  func.func @transform_9(%arg0: i32) -> (i32, i32) {
    %c0_i32 = arith.constant 0 : i32
    %c0_i32_0 = arith.constant 0 : i32
    %c0_i32_1 = arith.constant 0 : i32
    return %c0_i32, %c0_i32_0 : i32, i32
  }
  func.func @transform_10(%arg0: i32) -> (i32, i32) {
    %c0_i32 = arith.constant 0 : i32
    %c0_i32_0 = arith.constant 0 : i32
    %c0_i32_1 = arith.constant 0 : i32
    return %c0_i32, %c0_i32_0 : i32, i32
  }
  func.func @transform_11(%arg0: i32) -> (i32, i32) {
    %c0_i32 = arith.constant 0 : i32
    %c0_i32_0 = arith.constant 0 : i32
    %c0_i32_1 = arith.constant 0 : i32
    return %c0_i32, %c0_i32_0 : i32, i32
  }
}

</mosaic_0001>

<llo_original>
// kernel: cnn_forward.1
$region0: #{cnn_forward.1}
  #allocation0 [shape = 'u32[]', space=smem, size = 0x4, offset = 0x4, fixed_abs, tag = 'smem constant byte address 0x4 - core index']
  #allocation1 [shape = 'u32[144,128]{1,0:T(1,128)}', space=vmem, size = 0x12000, scoped, tag = 'internal scratch']
  %s0 = inlined_call_operand.vmem [shape: s32[32,1], index: 0, kind: input, shape index: {}]
  %s1 = inlined_call_operand.vmem [shape: s32[32,1], index: 1, kind: input, shape index: {}]
  %s2 = inlined_call_operand.vmem [shape: s32[32,1], index: 2, kind: input, shape index: {}]
  %s3 = inlined_call_operand.vmem [shape: f32[32,1], index: 3, kind: input, shape index: {}]
  %s4 = inlined_call_operand.vmem [shape: f32[50,32], index: 4, kind: input, shape index: {}]
  %s5 = inlined_call_operand.vmem [shape: f32[20,16], index: 5, kind: input, shape index: {}]
  %s6 = inlined_call_operand.vmem [shape: f32[20,16], index: 6, kind: input, shape index: {}]
  %s7 = inlined_call_operand.vmem [shape: f32[192,32], index: 7, kind: input, shape index: {}]
  %s8 = inlined_call_operand.vmem [shape: f32[1,32], index: 8, kind: input, shape index: {}]
  %s9 = inlined_call_operand.vmem [shape: f32[32,4], index: 9, kind: input, shape index: {}]
  %s10 = inlined_call_operand.vmem [shape: f32[1,4], index: 10, kind: input, shape index: {}]
  %s11 = inlined_call_operand.hbm [shape: f32[2,4], index: 11, kind: output, shape index: {}]
  %s12 = sld [smem:[#allocation0]]
  $region54: #{cnn_forward.1} parent=0
    _
  %s14 = ssub.s32 1, %s12
  %s15 = scalar_select 0, %s14, %s12
  $region1: #{cnn_forward.1} parent=0
    #allocation2 [shape = 'u8[1024]{0}', space=vmem, size = 0x400, scoped, tag = 'output window, operand 0, single buffered']
    #allocation3 [shape = 's32[1]{0}', space=sflag, size = 0x4, scoped, tag = 'scoped memory for cnn_forward.1']
    %16 = vsyncpa [#allocation3], 0
    // Predicated region
    $region2: #{cnn_forward.1} parent=1 // pred_check
      _
    $region3: #{cnn_forward.1} parent=1 // pred_check_branch
      %18 = sbr.rel (0) target = $region5
    $region4: #{cnn_forward.1} parent=1 // pred_region
      _
    $region5: #{cnn_forward.1} parent=1 // pred_fallthru
      _
    // Predicated region
    $region6: #{cnn_forward.1} parent=1 // pred_check
      _
    $region7: #{cnn_forward.1} parent=1 // pred_check_branch
      %20 = sbr.rel (0) target = $region9
    $region8: #{cnn_forward.1} parent=1 // pred_region
      _
    $region9: #{cnn_forward.1} parent=1 // pred_fallthru
      _
    // Predicated region
    $region10: #{cnn_forward.1} parent=1 // pred_check
      _
    $region11: #{cnn_forward.1} parent=1 // pred_check_branch
      %22 = sbr.rel (0) target = $region13
    $region12: #{cnn_forward.1} parent=1 // pred_region
      _
    $region13: #{cnn_forward.1} parent=1 // pred_fallthru
      _
    // Predicated region
    $region14: #{cnn_forward.1} parent=1 // pred_check
      _
    $region15: #{cnn_forward.1} parent=1 // pred_check_branch
      %24 = sbr.rel (0) target = $region17
    $region16: #{cnn_forward.1} parent=1 // pred_region
      _
    $region17: #{cnn_forward.1} parent=1 // pred_fallthru
      _
    // Predicated region
    $region18: #{cnn_forward.1} parent=1 // pred_check
      _
    $region19: #{cnn_forward.1} parent=1 // pred_check_branch
      %26 = sbr.rel (0) target = $region21
    $region20: #{cnn_forward.1} parent=1 // pred_region
      _
    $region21: #{cnn_forward.1} parent=1 // pred_fallthru
      _
    // Predicated region
    $region22: #{cnn_forward.1} parent=1 // pred_check
      _
    $region23: #{cnn_forward.1} parent=1 // pred_check_branch
      %28 = sbr.rel (0) target = $region25
    $region24: #{cnn_forward.1} parent=1 // pred_region
      _
    $region25: #{cnn_forward.1} parent=1 // pred_fallthru
      _
    // Predicated region
    $region26: #{cnn_forward.1} parent=1 // pred_check
      _
    $region27: #{cnn_forward.1} parent=1 // pred_check_branch
      %30 = sbr.rel (0) target = $region29
    $region28: #{cnn_forward.1} parent=1 // pred_region
      _
    $region29: #{cnn_forward.1} parent=1 // pred_fallthru
      _
    // Predicated region
    $region30: #{cnn_forward.1} parent=1 // pred_check
      _
    $region31: #{cnn_forward.1} parent=1 // pred_check_branch
      %32 = sbr.rel (0) target = $region33
    $region32: #{cnn_forward.1} parent=1 // pred_region
      _
    $region33: #{cnn_forward.1} parent=1 // pred_fallthru
      _
    // Predicated region
    $region34: #{cnn_forward.1} parent=1 // pred_check
      _
    $region35: #{cnn_forward.1} parent=1 // pred_check_branch
      %34 = sbr.rel (0) target = $region37
    $region36: #{cnn_forward.1} parent=1 // pred_region
      _
    $region37: #{cnn_forward.1} parent=1 // pred_fallthru
      _
    // Predicated region
    $region38: #{cnn_forward.1} parent=1 // pred_check
      _
    $region39: #{cnn_forward.1} parent=1 // pred_check_branch
      %36 = sbr.rel (0) target = $region41
    $region40: #{cnn_forward.1} parent=1 // pred_region
      _
    $region41: #{cnn_forward.1} parent=1 // pred_fallthru
      _
    // Predicated region
    $region42: #{cnn_forward.1} parent=1 // pred_check
      _
    $region43: #{cnn_forward.1} parent=1 // pred_check_branch
      %38 = sbr.rel (0) target = $region45
    $region44: #{cnn_forward.1} parent=1 // pred_region
      _
    $region45: #{cnn_forward.1} parent=1 // pred_fallthru
      _
    %v39 = vld [vmem:[%s0] sm:$0xff]
    %v40 = vld [vmem:[%s0 + $0x8] sm:$0xff]
    %v41 = vld [vmem:[%s0 + $0x10] sm:$0xff]
    %v42 = vld [vmem:[%s0 + $0x18] sm:$0xff]
    %v43 = vlaneseq
    %v44 = vand.u32 %v43, 127
    %45 = vset.pattern.permute.xlu0 0
    %46 = vperm.xlu0 %45, %v39
    %v47 = vpop.permute.xlu0 %46
    %48 = vset.pattern.permute.xlu0 0
    %49 = vperm.xlu0 %48, %v40
    %v50 = vpop.permute.xlu0 %49
    %51 = vset.pattern.permute.xlu0 0
    %52 = vperm.xlu0 %51, %v41
    %v53 = vpop.permute.xlu0 %52
    %54 = vset.pattern.permute.xlu0 0
    %55 = vperm.xlu0 %54, %v42
    %v56 = vpop.permute.xlu0 %55
    %vm57 = vcmp.eq.s32.totalorder %v44, %v47
    %vm58 = vcmp.eq.s32.totalorder %v44, %v50
    %vm59 = vcmp.eq.s32.totalorder %v44, %v53
    %vm60 = vcmp.eq.s32.totalorder %v44, %v56
    %v61 = vsel %vm57, 1, 0
    %v62 = vsel %vm58, 1, 0
    %v63 = vsel %vm59, 1, 0
    %v64 = vsel %vm60, 1, 0
    %v65 = vcvt.s32.f32 %v61
    %v66 = vcvt.s32.f32 %v62
    %v67 = vcvt.s32.f32 %v63
    %v68 = vcvt.s32.f32 %v64
    %v69 = vld [vmem:[%s4] sm:$0xff]
    %v70 = vld [vmem:[%s4 + $0x8] sm:$0xff]
    %v71 = vld [vmem:[%s4 + $0x10] sm:$0xff]
    %v72 = vld [vmem:[%s4 + $0x18] sm:$0xff]
    %v73 = vld [vmem:[%s4 + $0x20] sm:$0xff]
    %v74 = vld [vmem:[%s4 + $0x28] sm:$0xff]
    %v75 = vld [vmem:[%s4 + $0x30] sm:$0x3]
    %vm76 = vcmask 408576
    %v78 = vsel %vm76, %v65, 0
    %v81 = vsel %vm76, %v66, 0
    %v84 = vsel %vm76, %v67, 0
    %v87 = vsel %vm76, %v68, 0
    %vm89 = vcmask 1041408
    %v91 = vsel %vm89, %v75, 0
    %93 = vmatprep.subr.mxu0 0.0
    %94 = vmatpush1.msra.mxu0 %v69
    %95 = vmatprep.subr.mxu0 0.0
    %96 = vmatpush1.msra.mxu0 %v70
    %97 = vmatprep.subr.mxu0 0.0
    %98 = vmatpush1.msra.mxu0 %v71
    %99 = vmatprep.subr.mxu0 0.0
    %100 = vmatpush1.msra.mxu0 %v72
    %101 = vmatprep.subr.mxu0 0.0
    %102 = vmatpush1.msra.mxu0 %v73
    %103 = vmatprep.subr.mxu0 0.0
    %104 = vmatpush1.msra.mxu0 %v74
    %105 = vmatprep.subr.mxu0 0.0
    %106 = vmatpush1.msra.mxu0 %v91
    %107 = vmatprep.subr.mxu0 0.0
    %108 = vmatpush1.msra.mxu0 0.0
    %109 = vmatprep.subr.mxu0 0.0
    %110 = vmatpush1.msra.mxu0 0.0
    %111 = vmatprep.subr.mxu0 0.0
    %112 = vmatpush1.msra.mxu0 0.0
    %113 = vmatprep.subr.mxu0 0.0
    %114 = vmatpush1.msra.mxu0 0.0
    %115 = vmatprep.subr.mxu0 0.0
    %116 = vmatpush1.msra.mxu0 0.0
    %117 = vmatprep.subr.mxu0 0.0
    %118 = vmatpush1.msra.mxu0 0.0
    %119 = vmatprep.subr.mxu0 0.0
    %120 = vmatpush1.msra.mxu0 0.0
    %121 = vmatprep.subr.mxu0 0.0
    %122 = vmatpush1.msra.mxu0 0.0
    %123 = vmatprep.subr.mxu0 0.0
    %124 = vmatpush1.msra.mxu0 0.0
    %125 = vmatprep.subr.mxu0 0.0
    %126 = vmatpush1.msra.mxu0 0.0
    %127 = vmatprep.subr.mxu0 0.0
    %128 = vmatpush1.msra.mxu0 0.0
    %129 = vmatprep.subr.mxu0 0.0
    %130 = vmatpush1.msra.mxu0 0.0
    %131 = vmatprep.subr.mxu0 0.0
    %132 = vmatpush1.msra.mxu0 0.0
    %133 = vmatprep.subr.mxu0 0.0
    %134 = vmatpush1.msra.mxu0 0.0
    %135 = vmatprep.subr.mxu0 0.0
    %136 = vmatpush1.msra.mxu0 0.0
    %137 = vmatprep.subr.mxu0 0.0
    %138 = vmatpush1.msra.mxu0 0.0
    %139 = vmatprep.subr.mxu0 0.0
    %140 = vmatpush1.msra.mxu0 0.0
    %141 = vmatprep.subr.mxu0 0.0
    %142 = vmatpush1.msra.mxu0 0.0
    %143 = vmatprep.subr.mxu0 0.0
    %144 = vmatpush1.msra.mxu0 0.0
    %145 = vmatprep.subr.mxu0 0.0
    %146 = vmatpush1.msra.mxu0 0.0
    %147 = vmatprep.subr.mxu0 0.0
    %148 = vmatpush1.msra.mxu0 0.0
    %149 = vmatprep.subr.mxu0 0.0
    %150 = vmatpush1.msra.mxu0 0.0
    %151 = vmatprep.subr.mxu0 0.0
    %152 = vmatpush1.msra.mxu0 0.0
    %153 = vmatprep.subr.mxu0 0.0
    %154 = vmatpush1.msra.mxu0 0.0
    %155 = vmatprep.subr.mxu0 0.0
    %156 = vmatpush1.msra.mxu0 0.0
    %157 = vmatprep.mubr.f32.mxu0 0.0
    %158 = vmatmul.mubr.f32.gmra.mrb[0].mxu0 %v78
    %v159 = vpop.f32.mrb[0].mxu0
    %v160 = vadd.f32 0.0, %v159
    %v161 = vpop.f32.mrb[0].mxu0
    %162 = vmatprep.mubr.f32.mxu0 0.0
    %163 = vmatmul.mubr.f32.gmra.mrb[0].mxu0 %v81
    %v164 = vpop.f32.mrb[0].mxu0
    %v165 = vadd.f32 0.0, %v164
    %v166 = vpop.f32.mrb[0].mxu0
    %167 = vmatprep.mubr.f32.mxu0 0.0
    %168 = vmatmul.mubr.f32.gmra.mrb[0].mxu0 %v84
    %v169 = vpop.f32.mrb[0].mxu0
    %v170 = vadd.f32 0.0, %v169
    %v171 = vpop.f32.mrb[0].mxu0
    %172 = vmatprep.mubr.f32.mxu0 0.0
    %173 = vmatmul.mubr.f32.gmra.mrb[0].mxu0 %v87
    %v174 = vpop.f32.mrb[0].mxu0
    %v175 = vadd.f32 0.0, %v174
    %v176 = vpop.f32.mrb[0].mxu0
    %177 = vdwg.mxu0
    %v178 = vld [vmem:[%s1] sm:$0xff]
    %v179 = vld [vmem:[%s1 + $0x8] sm:$0xff]
    %v180 = vld [vmem:[%s1 + $0x10] sm:$0xff]
    %v181 = vld [vmem:[%s1 + $0x18] sm:$0xff]
    %182 = vset.pattern.permute.xlu0 0
    %183 = vperm.xlu0 %182, %v178
    %v184 = vpop.permute.xlu0 %183
    %185 = vset.pattern.permute.xlu0 0
    %186 = vperm.xlu0 %185, %v179
    %v187 = vpop.permute.xlu0 %186
    %188 = vset.pattern.permute.xlu0 0
    %189 = vperm.xlu0 %188, %v180
    %v190 = vpop.permute.xlu0 %189
    %191 = vset.pattern.permute.xlu0 0
    %192 = vperm.xlu0 %191, %v181
    %v193 = vpop.permute.xlu0 %192
    %vm194 = vcmp.eq.s32.totalorder %v44, %v184
    %vm195 = vcmp.eq.s32.totalorder %v44, %v187
    %vm196 = vcmp.eq.s32.totalorder %v44, %v190
    %vm197 = vcmp.eq.s32.totalorder %v44, %v193
    %v198 = vsel %vm194, 1, 0
    %v199 = vsel %vm195, 1, 0
    %v200 = vsel %vm196, 1, 0
    %v201 = vsel %vm197, 1, 0
    %v202 = vcvt.s32.f32 %v198
    %v203 = vcvt.s32.f32 %v199
    %v204 = vcvt.s32.f32 %v200
    %v205 = vcvt.s32.f32 %v201
    %v206 = vld [vmem:[%s5] sm:$0xff]
    %v207 = vld [vmem:[%s5 + $0x8] sm:$0xff]
    %v208 = vld [vmem:[%s5 + $0x10] sm:$0xf]
    %vm209 = vcmask 162816
    %v211 = vsel %vm209, %v202, 0
    %v214 = vsel %vm209, %v203, 0
    %v217 = vsel %vm209, %v204, 0
    %v220 = vsel %vm209, %v205, 0
    %vm222 = vcmask 1043456
    %v224 = vsel %vm222, %v208, 0
    %226 = vmatprep.subr.mxu0 0.0
    %227 = vmatpush1.msra.mxu0 %v206
    %228 = vmatprep.subr.mxu0 0.0
    %229 = vmatpush1.msra.mxu0 %v207
    %230 = vmatprep.subr.mxu0 0.0
    %231 = vmatpush1.msra.mxu0 %v224
    %232 = vmatprep.subr.mxu0 0.0
    %233 = vmatpush1.msra.mxu0 0.0
    %234 = vmatprep.subr.mxu0 0.0
    %235 = vmatpush1.msra.mxu0 0.0
    %236 = vmatprep.subr.mxu0 0.0
    %237 = vmatpush1.msra.mxu0 0.0
    %238 = vmatprep.subr.mxu0 0.0
    %239 = vmatpush1.msra.mxu0 0.0
    %240 = vmatprep.subr.mxu0 0.0
    %241 = vmatpush1.msra.mxu0 0.0
    %242 = vmatprep.subr.mxu0 0.0
    %243 = vmatpush1.msra.mxu0 0.0
    %244 = vmatprep.subr.mxu0 0.0
    %245 = vmatpush1.msra.mxu0 0.0
    %246 = vmatprep.subr.mxu0 0.0
    %247 = vmatpush1.msra.mxu0 0.0
    %248 = vmatprep.subr.mxu0 0.0
    %249 = vmatpush1.msra.mxu0 0.0
    %250 = vmatprep.subr.mxu0 0.0
    %251 = vmatpush1.msra.mxu0 0.0
    %252 = vmatprep.subr.mxu0 0.0
    %253 = vmatpush1.msra.mxu0 0.0
    %254 = vmatprep.subr.mxu0 0.0
    %255 = vmatpush1.msra.mxu0 0.0
    %256 = vmatprep.subr.mxu0 0.0
    %257 = vmatpush1.msra.mxu0 0.0
    %258 = vmatprep.subr.mxu0 0.0
    %259 = vmatpush1.msra.mxu0 0.0
    %260 = vmatprep.subr.mxu0 0.0
    %261 = vmatpush1.msra.mxu0 0.0
    %262 = vmatprep.subr.mxu0 0.0
    %263 = vmatpush1.msra.mxu0 0.0
    %264 = vmatprep.subr.mxu0 0.0
    %265 = vmatpush1.msra.mxu0 0.0
    %266 = vmatprep.subr.mxu0 0.0
    %267 = vmatpush1.msra.mxu0 0.0
    %268 = vmatprep.subr.mxu0 0.0
    %269 = vmatpush1.msra.mxu0 0.0
    %270 = vmatprep.subr.mxu0 0.0
    %271 = vmatpush1.msra.mxu0 0.0
    %272 = vmatprep.subr.mxu0 0.0
    %273 = vmatpush1.msra.mxu0 0.0
    %274 = vmatprep.subr.mxu0 0.0
    %275 = vmatpush1.msra.mxu0 0.0
    %276 = vmatprep.subr.mxu0 0.0
    %277 = vmatpush1.msra.mxu0 0.0
    %278 = vmatprep.subr.mxu0 0.0
    %279 = vmatpush1.msra.mxu0 0.0
    %280 = vmatprep.subr.mxu0 0.0
    %281 = vmatpush1.msra.mxu0 0.0
    %282 = vmatprep.subr.mxu0 0.0
    %283 = vmatpush1.msra.mxu0 0.0
    %284 = vmatprep.subr.mxu0 0.0
    %285 = vmatpush1.msra.mxu0 0.0
    %286 = vmatprep.subr.mxu0 0.0
    %287 = vmatpush1.msra.mxu0 0.0
    %288 = vmatprep.subr.mxu0 0.0
    %289 = vmatpush1.msra.mxu0 0.0
    %290 = vmatprep.mubr.f32.mxu0 0.0
    %291 = vmatmul.mubr.f32.gmra.mrb[0].mxu0 %v211
    %v292 = vpop.f32.mrb[0].mxu0
    %v293 = vadd.f32 0.0, %v292
    %v294 = vpop.f32.mrb[0].mxu0
    %295 = vmatprep.mubr.f32.mxu0 0.0
    %296 = vmatmul.mubr.f32.gmra.mrb[0].mxu0 %v214
    %v297 = vpop.f32.mrb[0].mxu0
    %v298 = vadd.f32 0.0, %v297
    %v299 = vpop.f32.mrb[0].mxu0
    %300 = vmatprep.mubr.f32.mxu0 0.0
    %301 = vmatmul.mubr.f32.gmra.mrb[0].mxu0 %v217
    %v302 = vpop.f32.mrb[0].mxu0
    %v303 = vadd.f32 0.0, %v302
    %v304 = vpop.f32.mrb[0].mxu0
    %305 = vmatprep.mubr.f32.mxu0 0.0
    %306 = vmatmul.mubr.f32.gmra.mrb[0].mxu0 %v220
    %v307 = vpop.f32.mrb[0].mxu0
    %v308 = vadd.f32 0.0, %v307
    %v309 = vpop.f32.mrb[0].mxu0
    %310 = vdwg.mxu0
    %v311 = vld [vmem:[%s2] sm:$0xff]
    %v312 = vld [vmem:[%s2 + $0x8] sm:$0xff]
    %v313 = vld [vmem:[%s2 + $0x10] sm:$0xff]
    %v314 = vld [vmem:[%s2 + $0x18] sm:$0xff]
    %315 = vset.pattern.permute.xlu0 0
    %316 = vperm.xlu0 %315, %v311
    %v317 = vpop.permute.xlu0 %316
    %318 = vset.pattern.permute.xlu0 0
    %319 = vperm.xlu0 %318, %v312
    %v320 = vpop.permute.xlu0 %319
    %321 = vset.pattern.permute.xlu0 0
    %322 = vperm.xlu0 %321, %v313
    %v323 = vpop.permute.xlu0 %322
    %324 = vset.pattern.permute.xlu0 0
    %325 = vperm.xlu0 %324, %v314
    %v326 = vpop.permute.xlu0 %325
    %vm327 = vcmp.eq.s32.totalorder %v44, %v317
    %vm328 = vcmp.eq.s32.totalorder %v44, %v320
    %vm329 = vcmp.eq.s32.totalorder %v44, %v323
    %vm330 = vcmp.eq.s32.totalorder %v44, %v326
    %v331 = vsel %vm327, 1, 0
    %v332 = vsel %vm328, 1, 0
    %v333 = vsel %vm329, 1, 0
    %v334 = vsel %vm330, 1, 0
    %v335 = vcvt.s32.f32 %v331
    %v336 = vcvt.s32.f32 %v332
    %v337 = vcvt.s32.f32 %v333
    %v338 = vcvt.s32.f32 %v334
    %v339 = vld [vmem:[%s6] sm:$0xff]
    %v340 = vld [vmem:[%s6 + $0x8] sm:$0xff]
    %v341 = vld [vmem:[%s6 + $0x10] sm:$0xf]
    %v343 = vsel %vm209, %v335, 0
    %v346 = vsel %vm209, %v336, 0
    %v349 = vsel %vm209, %v337, 0
    %v352 = vsel %vm209, %v338, 0
    %v355 = vsel %vm222, %v341, 0
    %357 = vmatprep.subr.mxu0 0.0
    %358 = vmatpush1.msra.mxu0 %v339
    %359 = vmatprep.subr.mxu0 0.0
    %360 = vmatpush1.msra.mxu0 %v340
    %361 = vmatprep.subr.mxu0 0.0
    %362 = vmatpush1.msra.mxu0 %v355
    %363 = vmatprep.subr.mxu0 0.0
    %364 = vmatpush1.msra.mxu0 0.0
    %365 = vmatprep.subr.mxu0 0.0
    %366 = vmatpush1.msra.mxu0 0.0
    %367 = vmatprep.subr.mxu0 0.0
    %368 = vmatpush1.msra.mxu0 0.0
    %369 = vmatprep.subr.mxu0 0.0
    %370 = vmatpush1.msra.mxu0 0.0
    %371 = vmatprep.subr.mxu0 0.0
    %372 = vmatpush1.msra.mxu0 0.0
    %373 = vmatprep.subr.mxu0 0.0
    %374 = vmatpush1.msra.mxu0 0.0
    %375 = vmatprep.subr.mxu0 0.0
    %376 = vmatpush1.msra.mxu0 0.0
    %377 = vmatprep.subr.mxu0 0.0
    %378 = vmatpush1.msra.mxu0 0.0
    %379 = vmatprep.subr.mxu0 0.0
    %380 = vmatpush1.msra.mxu0 0.0
    %381 = vmatprep.subr.mxu0 0.0
    %382 = vmatpush1.msra.mxu0 0.0
    %383 = vmatprep.subr.mxu0 0.0
    %384 = vmatpush1.msra.mxu0 0.0
    %385 = vmatprep.subr.mxu0 0.0
    %386 = vmatpush1.msra.mxu0 0.0
    %387 = vmatprep.subr.mxu0 0.0
    %388 = vmatpush1.msra.mxu0 0.0
    %389 = vmatprep.subr.mxu0 0.0
    %390 = vmatpush1.msra.mxu0 0.0
    %391 = vmatprep.subr.mxu0 0.0
    %392 = vmatpush1.msra.mxu0 0.0
    %393 = vmatprep.subr.mxu0 0.0
    %394 = vmatpush1.msra.mxu0 0.0
    %395 = vmatprep.subr.mxu0 0.0
    %396 = vmatpush1.msra.mxu0 0.0
    %397 = vmatprep.subr.mxu0 0.0
    %398 = vmatpush1.msra.mxu0 0.0
    %399 = vmatprep.subr.mxu0 0.0
    %400 = vmatpush1.msra.mxu0 0.0
    %401 = vmatprep.subr.mxu0 0.0
    %402 = vmatpush1.msra.mxu0 0.0
    %403 = vmatprep.subr.mxu0 0.0
    %404 = vmatpush1.msra.mxu0 0.0
    %405 = vmatprep.subr.mxu0 0.0
    %406 = vmatpush1.msra.mxu0 0.0
    %407 = vmatprep.subr.mxu0 0.0
    %408 = vmatpush1.msra.mxu0 0.0
    %409 = vmatprep.subr.mxu0 0.0
    %410 = vmatpush1.msra.mxu0 0.0
    %411 = vmatprep.subr.mxu0 0.0
    %412 = vmatpush1.msra.mxu0 0.0
    %413 = vmatprep.subr.mxu0 0.0
    %414 = vmatpush1.msra.mxu0 0.0
    %415 = vmatprep.subr.mxu0 0.0
    %416 = vmatpush1.msra.mxu0 0.0
    %417 = vmatprep.subr.mxu0 0.0
    %418 = vmatpush1.msra.mxu0 0.0
    %419 = vmatprep.subr.mxu0 0.0
    %420 = vmatpush1.msra.mxu0 0.0
    %421 = vmatprep.mubr.f32.mxu0 0.0
    %422 = vmatmul.mubr.f32.gmra.mrb[0].mxu0 %v343
    %v423 = vpop.f32.mrb[0].mxu0
    %v424 = vadd.f32 0.0, %v423
    %v425 = vpop.f32.mrb[0].mxu0
    %426 = vmatprep.mubr.f32.mxu0 0.0
    %427 = vmatmul.mubr.f32.gmra.mrb[0].mxu0 %v346
    %v428 = vpop.f32.mrb[0].mxu0
    %v429 = vadd.f32 0.0, %v428
    %v430 = vpop.f32.mrb[0].mxu0
    %431 = vmatprep.mubr.f32.mxu0 0.0
    %432 = vmatmul.mubr.f32.gmra.mrb[0].mxu0 %v349
    %v433 = vpop.f32.mrb[0].mxu0
    %v434 = vadd.f32 0.0, %v433
    %v435 = vpop.f32.mrb[0].mxu0
    %436 = vmatprep.mubr.f32.mxu0 0.0
    %437 = vmatmul.mubr.f32.gmra.mrb[0].mxu0 %v352
    %v438 = vpop.f32.mrb[0].mxu0
    %v439 = vadd.f32 0.0, %v438
    %v440 = vpop.f32.mrb[0].mxu0
    %441 = vdwg.mxu0
    %446 = vrot.lane.b32.xlu0 %v293, 32
    %v447 = vpop.permute.xlu0 %446
    %448 = vrot.lane.b32.xlu0 %v298, 32
    %v449 = vpop.permute.xlu0 %448
    %450 = vrot.lane.b32.xlu0 %v303, 32
    %v451 = vpop.permute.xlu0 %450
    %452 = vrot.lane.b32.xlu0 %v308, 32
    %v453 = vpop.permute.xlu0 %452
    %462 = vrot.lane.b32.xlu0 %v424, 48
    %v463 = vpop.permute.xlu0 %462
    %464 = vrot.lane.b32.xlu0 %v429, 48
    %v465 = vpop.permute.xlu0 %464
    %466 = vrot.lane.b32.xlu0 %v434, 48
    %v467 = vpop.permute.xlu0 %466
    %468 = vrot.lane.b32.xlu0 %v439, 48
    %v469 = vpop.permute.xlu0 %468
    %vm474 = vcmask 261120
    %v475 = vsel %vm474, %v160, %v447
    %v476 = vsel %vm474, %v165, %v449
    %v477 = vsel %vm474, %v170, %v451
    %v478 = vsel %vm474, %v175, %v453
    %vm479 = vcmask 392192
    %v480 = vsel %vm479, %v475, %v463
    %v481 = vsel %vm479, %v476, %v465
    %v482 = vsel %vm479, %v477, %v467
    %v483 = vsel %vm479, %v478, %v469
    %v484 = vld [vmem:[%s3] sm:$0xff]
    %v485 = vld [vmem:[%s3 + $0x8] sm:$0xff]
    %v486 = vld [vmem:[%s3 + $0x10] sm:$0xff]
    %v487 = vld [vmem:[%s3 + $0x18] sm:$0xff]
    %489 = vset.pattern.permute.xlu0 0
    %490 = vperm.xlu0 %489, %v484
    %v491 = vpop.permute.xlu0 %490
    %494 = vset.pattern.permute.xlu0 0
    %495 = vperm.xlu0 %494, %v485
    %v496 = vpop.permute.xlu0 %495
    %499 = vset.pattern.permute.xlu0 0
    %500 = vperm.xlu0 %499, %v486
    %v501 = vpop.permute.xlu0 %500
    %504 = vset.pattern.permute.xlu0 0
    %505 = vperm.xlu0 %504, %v487
    %v506 = vpop.permute.xlu0 %505
    %v508 = vmul.f32 %v480, %v491
    %v509 = vmul.f32 %v481, %v496
    %v510 = vmul.f32 %v482, %v501
    %v511 = vmul.f32 %v483, %v506
    %v512 = vlaneseq
    %v513 = vshrl.u32 %v512, 7
    %v514 = vadd.s32 %v513, 8
    %v515 = vadd.s32 %v513, 16
    %v516 = vadd.s32 %v513, 24
    %vm517 = vcmp.eq.s32.totalorder %v513, 0
    %vm518 = vcmp.eq.s32.totalorder %v514, 0
    %vm519 = vcmp.eq.s32.totalorder %v515, 0
    %vm520 = vcmp.eq.s32.totalorder %v516, 0
    %vm521 = vcmp.eq.s32.totalorder %v513, 15
    %vm522 = vcmp.eq.s32.totalorder %v514, 15
    %vm523 = vcmp.eq.s32.totalorder %v515, 15
    %vm524 = vcmp.eq.s32.totalorder %v516, 15
    %vm525 = vcmp.eq.s32.totalorder %v513, 16
    %vm526 = vcmp.eq.s32.totalorder %v514, 16
    %vm527 = vcmp.eq.s32.totalorder %v515, 16
    %vm528 = vcmp.eq.s32.totalorder %v516, 16
    %vm529 = vmor %vm517, %vm525
    %vm530 = vmor %vm518, %vm526
    %vm531 = vmor %vm519, %vm527
    %vm532 = vmor %vm520, %vm528
    %vm533 = vcmp.eq.s32.totalorder %v513, 31
    %vm534 = vcmp.eq.s32.totalorder %v514, 31
    %vm535 = vcmp.eq.s32.totalorder %v515, 31
    %vm536 = vcmp.eq.s32.totalorder %v516, 31
    %vm537 = vmor %vm521, %vm533
    %vm538 = vmor %vm522, %vm534
    %vm539 = vmor %vm523, %vm535
    %vm540 = vmor %vm524, %vm536
    %v541 = vsub.s32 %v513, 1
    %v542 = vsub.s32 %v514, 1
    %v543 = vsub.s32 %v515, 1
    %v544 = vsub.s32 %v516, 1
    %vm545 = vcmp.eq.s32.totalorder %v44, %v541
    %vm546 = vcmp.eq.s32.totalorder %v44, %v542
    %vm547 = vcmp.eq.s32.totalorder %v44, %v543
    %vm548 = vcmp.eq.s32.totalorder %v44, %v544
    %vm549 = vmxor %vm529, 1
    %vm550 = vmxor %vm530, 1
    %vm551 = vmxor %vm531, 1
    %vm552 = vmxor %vm532, 1
    %vm553 = vmand %vm545, %vm549
    %vm554 = vmand %vm546, %vm550
    %vm555 = vmand %vm547, %vm551
    %vm556 = vmand %vm548, %vm552
    %v557 = vsel %vm553, 1, 0
    %v558 = vsel %vm554, 1, 0
    %v559 = vsel %vm555, 1, 0
    %v560 = vsel %vm556, 1, 0
    %v561 = vcvt.s32.f32 %v557
    %v562 = vcvt.s32.f32 %v558
    %v563 = vcvt.s32.f32 %v559
    %v564 = vcvt.s32.f32 %v560
    %v565 = vadd.s32 %v513, 1
    %v566 = vadd.s32 %v514, 1
    %v567 = vadd.s32 %v515, 1
    %v568 = vadd.s32 %v516, 1
    %vm569 = vcmp.eq.s32.totalorder %v44, %v565
    %vm570 = vcmp.eq.s32.totalorder %v44, %v566
    %vm571 = vcmp.eq.s32.totalorder %v44, %v567
    %vm572 = vcmp.eq.s32.totalorder %v44, %v568
    %vm573 = vmxor %vm537, 1
    %vm574 = vmxor %vm538, 1
    %vm575 = vmxor %vm539, 1
    %vm576 = vmxor %vm540, 1
    %vm577 = vmand %vm569, %vm573
    %vm578 = vmand %vm570, %vm574
    %vm579 = vmand %vm571, %vm575
    %vm580 = vmand %vm572, %vm576
    %v581 = vsel %vm577, 1, 0
    %v582 = vsel %vm578, 1, 0
    %v583 = vsel %vm579, 1, 0
    %v584 = vsel %vm580, 1, 0
    %v585 = vcvt.s32.f32 %v581
    %v586 = vcvt.s32.f32 %v582
    %v587 = vcvt.s32.f32 %v583
    %v588 = vcvt.s32.f32 %v584
    %v590 = vsel %vm474, %v561, 0
    %v593 = vsel %vm474, %v562, 0
    %v596 = vsel %vm474, %v563, 0
    %v599 = vsel %vm474, %v564, 0
    %601 = vmatprep.subr.mxu0 0.0
    %602 = vmatpush1.msra.mxu0 %v508
    %603 = vmatprep.subr.mxu0 0.0
    %604 = vmatpush1.msra.mxu0 %v509
    %605 = vmatprep.subr.mxu0 0.0
    %606 = vmatpush1.msra.mxu0 %v510
    %607 = vmatprep.subr.mxu0 0.0
    %608 = vmatpush1.msra.mxu0 %v511
    %609 = vmatprep.subr.mxu0 0.0
    %610 = vmatpush1.msra.mxu0 0.0
    %611 = vmatprep.subr.mxu0 0.0
    %612 = vmatpush1.msra.mxu0 0.0
    %613 = vmatprep.subr.mxu0 0.0
    %614 = vmatpush1.msra.mxu0 0.0
    %615 = vmatprep.subr.mxu0 0.0
    %616 = vmatpush1.msra.mxu0 0.0
    %617 = vmatprep.subr.mxu0 0.0
    %618 = vmatpush1.msra.mxu0 0.0
    %619 = vmatprep.subr.mxu0 0.0
    %620 = vmatpush1.msra.mxu0 0.0
    %621 = vmatprep.subr.mxu0 0.0
    %622 = vmatpush1.msra.mxu0 0.0
    %623 = vmatprep.subr.mxu0 0.0
    %624 = vmatpush1.msra.mxu0 0.0
    %625 = vmatprep.subr.mxu0 0.0
    %626 = vmatpush1.msra.mxu0 0.0
    %627 = vmatprep.subr.mxu0 0.0
    %628 = vmatpush1.msra.mxu0 0.0
    %629 = vmatprep.subr.mxu0 0.0
    %630 = vmatpush1.msra.mxu0 0.0
    %631 = vmatprep.subr.mxu0 0.0
    %632 = vmatpush1.msra.mxu0 0.0
    %633 = vmatprep.subr.mxu0 0.0
    %634 = vmatpush1.msra.mxu0 0.0
    %635 = vmatprep.subr.mxu0 0.0
    %636 = vmatpush1.msra.mxu0 0.0
    %637 = vmatprep.subr.mxu0 0.0
    %638 = vmatpush1.msra.mxu0 0.0
    %639 = vmatprep.subr.mxu0 0.0
    %640 = vmatpush1.msra.mxu0 0.0
    %641 = vmatprep.subr.mxu0 0.0
    %642 = vmatpush1.msra.mxu0 0.0
    %643 = vmatprep.subr.mxu0 0.0
    %644 = vmatpush1.msra.mxu0 0.0
    %645 = vmatprep.subr.mxu0 0.0
    %646 = vmatpush1.msra.mxu0 0.0
    %647 = vmatprep.subr.mxu0 0.0
    %648 = vmatpush1.msra.mxu0 0.0
    %649 = vmatprep.subr.mxu0 0.0
    %650 = vmatpush1.msra.mxu0 0.0
    %651 = vmatprep.subr.mxu0 0.0
    %652 = vmatpush1.msra.mxu0 0.0
    %653 = vmatprep.subr.mxu0 0.0
    %654 = vmatpush1.msra.mxu0 0.0
    %655 = vmatprep.subr.mxu0 0.0
    %656 = vmatpush1.msra.mxu0 0.0
    %657 = vmatprep.subr.mxu0 0.0
    %658 = vmatpush1.msra.mxu0 0.0
    %659 = vmatprep.subr.mxu0 0.0
    %660 = vmatpush1.msra.mxu0 0.0
    %661 = vmatprep.subr.mxu0 0.0
    %662 = vmatpush1.msra.mxu0 0.0
    %663 = vmatprep.subr.mxu0 0.0
    %664 = vmatpush1.msra.mxu0 0.0
    %665 = vmatprep.mubr.f32.mxu0 0.0
    %666 = vmatmul.mubr.f32.gmra.mrb[0].mxu0 %v590
    %v667 = vpop.f32.mrb[0].mxu0
    %v668 = vadd.f32 0.0, %v667
    %v669 = vpop.f32.mrb[0].mxu0
    %670 = vmatprep.mubr.f32.mxu0 0.0
    %671 = vmatmul.mubr.f32.gmra.mrb[0].mxu0 %v593
    %v672 = vpop.f32.mrb[0].mxu0
    %v673 = vadd.f32 0.0, %v672
    %v674 = vpop.f32.mrb[0].mxu0
    %675 = vmatprep.mubr.f32.mxu0 0.0
    %676 = vmatmul.mubr.f32.gmra.mrb[0].mxu0 %v596
    %v677 = vpop.f32.mrb[0].mxu0
    %v678 = vadd.f32 0.0, %v677
    %v679 = vpop.f32.mrb[0].mxu0
    %680 = vmatprep.mubr.f32.mxu0 0.0
    %681 = vmatmul.mubr.f32.gmra.mrb[0].mxu0 %v599
    %v682 = vpop.f32.mrb[0].mxu0
    %v683 = vadd.f32 0.0, %v682
    %v684 = vpop.f32.mrb[0].mxu0
    %685 = vdwg.mxu0
    %v687 = vsel %vm474, %v585, 0
    %v690 = vsel %vm474, %v586, 0
    %v693 = vsel %vm474, %v587, 0
    %v696 = vsel %vm474, %v588, 0
    %698 = vmatprep.subr.mxu0 0.0
    %699 = vmatpush1.msra.mxu0 %v508
    %700 = vmatprep.subr.mxu0 0.0
    %701 = vmatpush1.msra.mxu0 %v509
    %702 = vmatprep.subr.mxu0 0.0
    %703 = vmatpush1.msra.mxu0 %v510
    %704 = vmatprep.subr.mxu0 0.0
    %705 = vmatpush1.msra.mxu0 %v511
    %706 = vmatprep.subr.mxu0 0.0
    %707 = vmatpush1.msra.mxu0 0.0
    %708 = vmatprep.subr.mxu0 0.0
    %709 = vmatpush1.msra.mxu0 0.0
    %710 = vmatprep.subr.mxu0 0.0
    %711 = vmatpush1.msra.mxu0 0.0
    %712 = vmatprep.subr.mxu0 0.0
    %713 = vmatpush1.msra.mxu0 0.0
    %714 = vmatprep.subr.mxu0 0.0
    %715 = vmatpush1.msra.mxu0 0.0
    %716 = vmatprep.subr.mxu0 0.0
    %717 = vmatpush1.msra.mxu0 0.0
    %718 = vmatprep.subr.mxu0 0.0
    %719 = vmatpush1.msra.mxu0 0.0
    %720 = vmatprep.subr.mxu0 0.0
    %721 = vmatpush1.msra.mxu0 0.0
    %722 = vmatprep.subr.mxu0 0.0
    %723 = vmatpush1.msra.mxu0 0.0
    %724 = vmatprep.subr.mxu0 0.0
    %725 = vmatpush1.msra.mxu0 0.0
    %726 = vmatprep.subr.mxu0 0.0
    %727 = vmatpush1.msra.mxu0 0.0
    %728 = vmatprep.subr.mxu0 0.0
    %729 = vmatpush1.msra.mxu0 0.0
    %730 = vmatprep.subr.mxu0 0.0
    %731 = vmatpush1.msra.mxu0 0.0
    %732 = vmatprep.subr.mxu0 0.0
    %733 = vmatpush1.msra.mxu0 0.0
    %734 = vmatprep.subr.mxu0 0.0
    %735 = vmatpush1.msra.mxu0 0.0
    %736 = vmatprep.subr.mxu0 0.0
    %737 = vmatpush1.msra.mxu0 0.0
    %738 = vmatprep.subr.mxu0 0.0
    %739 = vmatpush1.msra.mxu0 0.0
    %740 = vmatprep.subr.mxu0 0.0
    %741 = vmatpush1.msra.mxu0 0.0
    %742 = vmatprep.subr.mxu0 0.0
    %743 = vmatpush1.msra.mxu0 0.0
    %744 = vmatprep.subr.mxu0 0.0
    %745 = vmatpush1.msra.mxu0 0.0
    %746 = vmatprep.subr.mxu0 0.0
    %747 = vmatpush1.msra.mxu0 0.0
    %748 = vmatprep.subr.mxu0 0.0
    %749 = vmatpush1.msra.mxu0 0.0
    %750 = vmatprep.subr.mxu0 0.0
    %751 = vmatpush1.msra.mxu0 0.0
    %752 = vmatprep.subr.mxu0 0.0
    %753 = vmatpush1.msra.mxu0 0.0
    %754 = vmatprep.subr.mxu0 0.0
    %755 = vmatpush1.msra.mxu0 0.0
    %756 = vmatprep.subr.mxu0 0.0
    %757 = vmatpush1.msra.mxu0 0.0
    %758 = vmatprep.subr.mxu0 0.0
    %759 = vmatpush1.msra.mxu0 0.0
    %760 = vmatprep.subr.mxu0 0.0
    %761 = vmatpush1.msra.mxu0 0.0
    %762 = vmatprep.mubr.f32.mxu0 0.0
    %763 = vmatmul.mubr.f32.gmra.mrb[0].mxu0 %v687
    %v764 = vpop.f32.mrb[0].mxu0
    %v765 = vadd.f32 0.0, %v764
    %v766 = vpop.f32.mrb[0].mxu0
    %767 = vmatprep.mubr.f32.mxu0 0.0
    %768 = vmatmul.mubr.f32.gmra.mrb[0].mxu0 %v690
    %v769 = vpop.f32.mrb[0].mxu0
    %v770 = vadd.f32 0.0, %v769
    %v771 = vpop.f32.mrb[0].mxu0
    %772 = vmatprep.mubr.f32.mxu0 0.0
    %773 = vmatmul.mubr.f32.gmra.mrb[0].mxu0 %v693
    %v774 = vpop.f32.mrb[0].mxu0
    %v775 = vadd.f32 0.0, %v774
    %v776 = vpop.f32.mrb[0].mxu0
    %777 = vmatprep.mubr.f32.mxu0 0.0
    %778 = vmatmul.mubr.f32.gmra.mrb[0].mxu0 %v696
    %v779 = vpop.f32.mrb[0].mxu0
    %v780 = vadd.f32 0.0, %v779
    %v781 = vpop.f32.mrb[0].mxu0
    %782 = vdwg.mxu0
    %787 = vrot.lane.b32.xlu0 %v508, 64
    %v788 = vpop.permute.xlu0 %787
    %789 = vrot.lane.b32.xlu0 %v509, 64
    %v790 = vpop.permute.xlu0 %789
    %791 = vrot.lane.b32.xlu0 %v510, 64
    %v792 = vpop.permute.xlu0 %791
    %793 = vrot.lane.b32.xlu0 %v511, 64
    %v794 = vpop.permute.xlu0 %793
    %vm799 = vcmask 523264
    %v800 = vsel %vm799, %v668, %v788
    %v801 = vsel %vm799, %v673, %v790
    %v802 = vsel %vm799, %v678, %v792
    %v803 = vsel %vm799, %v683, %v794
    %v804 = vld [vmem:[%s7] sm:$0xff]
    %v805 = vld [vmem:[%s7 + $0x8] sm:$0xff]
    %v806 = vld [vmem:[%s7 + $0x10] sm:$0xff]
    %v807 = vld [vmem:[%s7 + $0x18] sm:$0xff]
    %v808 = vld [vmem:[%s7 + $0x20] sm:$0xff]
    %v809 = vld [vmem:[%s7 + $0x28] sm:$0xff]
    %v810 = vld [vmem:[%s7 + $0x30] sm:$0xff]
    %v811 = vld [vmem:[%s7 + $0x38] sm:$0xff]
    %v812 = vld [vmem:[%s7 + $0x40] sm:$0xff]
    %v813 = vld [vmem:[%s7 + $0x48] sm:$0xff]
    %v814 = vld [vmem:[%s7 + $0x50] sm:$0xff]
    %v815 = vld [vmem:[%s7 + $0x58] sm:$0xff]
    %v816 = vld [vmem:[%s7 + $0x60] sm:$0xff]
    %v817 = vld [vmem:[%s7 + $0x68] sm:$0xff]
    %v818 = vld [vmem:[%s7 + $0x70] sm:$0xff]
    %v819 = vld [vmem:[%s7 + $0x78] sm:$0xff]
    %v820 = vld [vmem:[%s7 + $0x80] sm:$0xff]
    %v821 = vld [vmem:[%s7 + $0x88] sm:$0xff]
    %v822 = vld [vmem:[%s7 + $0x90] sm:$0xff]
    %v823 = vld [vmem:[%s7 + $0x98] sm:$0xff]
    %v824 = vld [vmem:[%s7 + $0xa0] sm:$0xff]
    %v825 = vld [vmem:[%s7 + $0xa8] sm:$0xff]
    %v826 = vld [vmem:[%s7 + $0xb0] sm:$0xff]
    %v827 = vld [vmem:[%s7 + $0xb8] sm:$0xff]
    %v828 = vld [vmem:[%s8] sm:$0x1]
    %v830 = vlaneseq
    %v831 = vshrl.u32 %v830, 7
    %v832 = vsub.s32 0, %v831
    %v833 = vrot.slane %v828, %v832
    %v836 = vsel %vm799, %v765, 0
    %v839 = vsel %vm799, %v770, 0
    %v842 = vsel %vm799, %v775, 0
    %v845 = vsel %vm799, %v780, 0
    %847 = vmatprep.subr.mxu0 0.0
    %848 = vmatpush1.msra.mxu0 %v804
    %849 = vmatprep.subr.mxu0 0.0
    %850 = vmatpush1.msra.mxu0 %v805
    %851 = vmatprep.subr.mxu0 0.0
    %852 = vmatpush1.msra.mxu0 %v806
    %853 = vmatprep.subr.mxu0 0.0
    %854 = vmatpush1.msra.mxu0 %v807
    %855 = vmatprep.subr.mxu0 0.0
    %856 = vmatpush1.msra.mxu0 %v808
    %857 = vmatprep.subr.mxu0 0.0
    %858 = vmatpush1.msra.mxu0 %v809
    %859 = vmatprep.subr.mxu0 0.0
    %860 = vmatpush1.msra.mxu0 %v810
    %861 = vmatprep.subr.mxu0 0.0
    %862 = vmatpush1.msra.mxu0 %v811
    %863 = vmatprep.subr.mxu0 0.0
    %864 = vmatpush1.msra.mxu0 %v812
    %865 = vmatprep.subr.mxu0 0.0
    %866 = vmatpush1.msra.mxu0 %v813
    %867 = vmatprep.subr.mxu0 0.0
    %868 = vmatpush1.msra.mxu0 %v814
    %869 = vmatprep.subr.mxu0 0.0
    %870 = vmatpush1.msra.mxu0 %v815
    %871 = vmatprep.subr.mxu0 0.0
    %872 = vmatpush1.msra.mxu0 %v816
    %873 = vmatprep.subr.mxu0 0.0
    %874 = vmatpush1.msra.mxu0 %v817
    %875 = vmatprep.subr.mxu0 0.0
    %876 = vmatpush1.msra.mxu0 %v818
    %877 = vmatprep.subr.mxu0 0.0
    %878 = vmatpush1.msra.mxu0 %v819
    %879 = vmatprep.subr.mxu0 0.0
    %880 = vmatpush1.msra.mxu0 %v820
    %881 = vmatprep.subr.mxu0 0.0
    %882 = vmatpush1.msra.mxu0 %v821
    %883 = vmatprep.subr.mxu0 0.0
    %884 = vmatpush1.msra.mxu0 %v822
    %885 = vmatprep.subr.mxu0 0.0
    %886 = vmatpush1.msra.mxu0 %v823
    %887 = vmatprep.subr.mxu0 0.0
    %888 = vmatpush1.msra.mxu0 %v824
    %889 = vmatprep.subr.mxu0 0.0
    %890 = vmatpush1.msra.mxu0 %v825
    %891 = vmatprep.subr.mxu0 0.0
    %892 = vmatpush1.msra.mxu0 %v826
    %893 = vmatprep.subr.mxu0 0.0
    %894 = vmatpush1.msra.mxu0 %v827
    %895 = vmatprep.subr.mxu0 0.0
    %896 = vmatpush1.msra.mxu0 0.0
    %897 = vmatprep.subr.mxu0 0.0
    %898 = vmatpush1.msra.mxu0 0.0
    %899 = vmatprep.subr.mxu0 0.0
    %900 = vmatpush1.msra.mxu0 0.0
    %901 = vmatprep.subr.mxu0 0.0
    %902 = vmatpush1.msra.mxu0 0.0
    %903 = vmatprep.subr.mxu0 0.0
    %904 = vmatpush1.msra.mxu0 0.0
    %905 = vmatprep.subr.mxu0 0.0
    %906 = vmatpush1.msra.mxu0 0.0
    %907 = vmatprep.subr.mxu0 0.0
    %908 = vmatpush1.msra.mxu0 0.0
    %909 = vmatprep.subr.mxu0 0.0
    %910 = vmatpush1.msra.mxu0 0.0
    %911 = vmatprep.mubr.f32.mxu0 %v836
    %912 = vmatmul.mubr.f32.gmra.mrb[0].mxu0 %v800
    %v913 = vpop.f32.mrb[0].mxu0
    %v914 = vadd.f32 %v833, %v913
    %v915 = vpop.f32.mrb[0].mxu0
    %916 = vmatprep.mubr.f32.mxu0 %v839
    %917 = vmatmul.mubr.f32.gmra.mrb[0].mxu0 %v801
    %v918 = vpop.f32.mrb[0].mxu0
    %v919 = vadd.f32 %v833, %v918
    %v920 = vpop.f32.mrb[0].mxu0
    %921 = vmatprep.mubr.f32.mxu0 %v842
    %922 = vmatmul.mubr.f32.gmra.mrb[0].mxu0 %v802
    %v923 = vpop.f32.mrb[0].mxu0
    %v924 = vadd.f32 %v833, %v923
    %v925 = vpop.f32.mrb[0].mxu0
    %926 = vmatprep.mubr.f32.mxu0 %v845
    %927 = vmatmul.mubr.f32.gmra.mrb[0].mxu0 %v803
    %v928 = vpop.f32.mrb[0].mxu0
    %v929 = vadd.f32 %v833, %v928
    %v930 = vpop.f32.mrb[0].mxu0
    %931 = vdwg.mxu0
    %v932 = vsel %vm474, %v914, -inf
    %v933 = vsel %vm474, %v919, -inf
    %v934 = vmax.f32 %v932, %v933
    %v935 = vrot.slane %v934, 4
    %v936 = vmax.f32 %v934, %v935
    %v937 = vrot.slane %v936, 2
    %v938 = vmax.f32 %v936, %v937
    %v939 = vrot.slane %v938, 1
    %v940 = vmax.f32 %v938, %v939
    %v941 = vsel %vm474, %v924, -inf
    %v942 = vsel %vm474, %v929, -inf
    %v943 = vmax.f32 %v941, %v942
    %v944 = vrot.slane %v943, 4
    %v945 = vmax.f32 %v943, %v944
    %v946 = vrot.slane %v945, 2
    %v947 = vmax.f32 %v945, %v946
    %v948 = vrot.slane %v947, 1
    %v949 = vmax.f32 %v947, %v948
    %vm950 = vcmask 1040384
    %v951 = vsel %vm950, %v940, %v949
    %v952 = vtanh.pop %v951
    %v953 = vld [vmem:[%s9] sm:$0xff]
    %v954 = vld [vmem:[%s9 + $0x8] sm:$0xff]
    %v955 = vld [vmem:[%s9 + $0x10] sm:$0xff]
    %v956 = vld [vmem:[%s9 + $0x18] sm:$0xff]
    %v957 = vld [vmem:[%s10] sm:$0x1]
    %v959 = vlaneseq
    %v960 = vshrl.u32 %v959, 7
    %v961 = vsub.s32 0, %v960
    %v962 = vrot.slane %v957, %v961
    %v965 = vsel %vm474, %v952, 0
    %967 = vmatprep.subr.mxu0 0.0
    %968 = vmatpush1.msra.mxu0 %v953
    %969 = vmatprep.subr.mxu0 0.0
    %970 = vmatpush1.msra.mxu0 %v954
    %971 = vmatprep.subr.mxu0 0.0
    %972 = vmatpush1.msra.mxu0 %v955
    %973 = vmatprep.subr.mxu0 0.0
    %974 = vmatpush1.msra.mxu0 %v956
    %975 = vmatprep.subr.mxu0 0.0
    %976 = vmatpush1.msra.mxu0 0.0
    %977 = vmatprep.subr.mxu0 0.0
    %978 = vmatpush1.msra.mxu0 0.0
    %979 = vmatprep.subr.mxu0 0.0
    %980 = vmatpush1.msra.mxu0 0.0
    %981 = vmatprep.subr.mxu0 0.0
    %982 = vmatpush1.msra.mxu0 0.0
    %983 = vmatprep.subr.mxu0 0.0
    %984 = vmatpush1.msra.mxu0 0.0
    %985 = vmatprep.subr.mxu0 0.0
    %986 = vmatpush1.msra.mxu0 0.0
    %987 = vmatprep.subr.mxu0 0.0
    %988 = vmatpush1.msra.mxu0 0.0
    %989 = vmatprep.subr.mxu0 0.0
    %990 = vmatpush1.msra.mxu0 0.0
    %991 = vmatprep.subr.mxu0 0.0
    %992 = vmatpush1.msra.mxu0 0.0
    %993 = vmatprep.subr.mxu0 0.0
    %994 = vmatpush1.msra.mxu0 0.0
    %995 = vmatprep.subr.mxu0 0.0
    %996 = vmatpush1.msra.mxu0 0.0
    %997 = vmatprep.subr.mxu0 0.0
    %998 = vmatpush1.msra.mxu0 0.0
    %999 = vmatprep.subr.mxu0 0.0
    %1000 = vmatpush1.msra.mxu0 0.0
    %1001 = vmatprep.subr.mxu0 0.0
    %1002 = vmatpush1.msra.mxu0 0.0
    %1003 = vmatprep.subr.mxu0 0.0
    %1004 = vmatpush1.msra.mxu0 0.0
    %1005 = vmatprep.subr.mxu0 0.0
    %1006 = vmatpush1.msra.mxu0 0.0
    %1007 = vmatprep.subr.mxu0 0.0
    %1008 = vmatpush1.msra.mxu0 0.0
    %1009 = vmatprep.subr.mxu0 0.0
    %1010 = vmatpush1.msra.mxu0 0.0
    %1011 = vmatprep.subr.mxu0 0.0
    %1012 = vmatpush1.msra.mxu0 0.0
    %1013 = vmatprep.subr.mxu0 0.0
    %1014 = vmatpush1.msra.mxu0 0.0
    %1015 = vmatprep.subr.mxu0 0.0
    %1016 = vmatpush1.msra.mxu0 0.0
    %1017 = vmatprep.subr.mxu0 0.0
    %1018 = vmatpush1.msra.mxu0 0.0
    %1019 = vmatprep.subr.mxu0 0.0
    %1020 = vmatpush1.msra.mxu0 0.0
    %1021 = vmatprep.subr.mxu0 0.0
    %1022 = vmatpush1.msra.mxu0 0.0
    %1023 = vmatprep.subr.mxu0 0.0
    %1024 = vmatpush1.msra.mxu0 0.0
    %1025 = vmatprep.subr.mxu0 0.0
    %1026 = vmatpush1.msra.mxu0 0.0
    %1027 = vmatprep.subr.mxu0 0.0
    %1028 = vmatpush1.msra.mxu0 0.0
    %1029 = vmatprep.subr.mxu0 0.0
    %1030 = vmatpush1.msra.mxu0 0.0
    %1031 = vmatprep.mubr.f32.mxu0 0.0
    %1032 = vmatmul.mubr.f32.gmra.mrb[0].mxu0 %v965
    %v1033 = vpop.f32.mrb[0].mxu0
    %v1034 = vadd.f32 %v962, %v1033
    %v1035 = vpop.f32.mrb[0].mxu0
    %1036 = vdwg.mxu0
    %vm1037 = vcmask 25600
    %1038 = vst.msk [vmem:[#allocation2] sm:$0x3] %vm1037, %v1034
    // Predicated region
    $region46: #{cnn_forward.1} parent=1 // pred_check
      _
    $region47: #{cnn_forward.1} parent=1 // pred_check_branch
      %1040 = sbr.rel (0) target = $region49
    $region48: #{cnn_forward.1} parent=1 // pred_region
      %s1042 = ssub.s32 32, 32
      %1043 = vsyncadd [#allocation3], %s1042
      %s1045 = sshll.u32 [#allocation2], 4
      %s1046 = int_to_ptr.vmem [resolvable:$true] %s1045
      %1048 = dma.vmem_to_hbm [thread:$0]  %s1046, 32, %s11, [#allocation3]
    $region49: #{cnn_forward.1} parent=1 // pred_fallthru
      _
    // Predicated region
    $region50: #{cnn_forward.1} parent=1 // pred_check
      _
    $region51: #{cnn_forward.1} parent=1 // pred_check_branch
      %1050 = sbr.rel (0) target = $region53
    $region52: #{cnn_forward.1} parent=1 // pred_region
      %1051 = dma.done [#allocation3], 32
    $region53: #{cnn_forward.1} parent=1 // pred_fallthru
      _
    %1052 = vsyncpa [#allocation3], 1

</llo_original>
